<compile_context>
chip_gen: v5e
topology: v5e:2x2
jax: 0.10.0
libtpu: 0.0.40
codegen_flags: <defaults>
</compile_context>

<pallas_src>
import numpy as np
import jax
import jax.numpy as jnp
from jax import lax
from jax.experimental import pallas as pl
from jax.experimental.pallas import tpu as pltpu


# ----------------------------------------------------------------------------
# SAME-padding computation (faithful port of getSAMEPadding, non-transposed)
# ----------------------------------------------------------------------------
def get_same_padding(tensor_shape, kernel_size, stride, dilation):
    spatial = np.asarray(tensor_shape)[2:]
    kernel_size = np.asarray(kernel_size)
    stride = np.asarray(stride)
    dilation = np.asarray(dilation)
    output_size = (spatial + stride - 1) // stride
    padding_input = np.maximum(
        0, (output_size - 1) * stride + (kernel_size - 1) * dilation + 1 - spatial)
    odd_padding = padding_input % 2 != 0
    sym_padding = tuple(int(p) for p in (padding_input // 2))
    unsym_padding = [y for x in odd_padding for y in [0, int(x)]]
    return sym_padding, unsym_padding


# ----------------------------------------------------------------------------
# Fused kernel: tap loop stages im2col patch into VMEM, then ONE MXU dot + bias
# ----------------------------------------------------------------------------
def _make_conv_kernel(*, B, Cin, Cout, KH, KW, sH, sW, OH, OW, K_pad):
    M = B * OH * OW

    def kernel(x_ref, w_ref, b_ref, o_ref, patch_ref):
        # x_ref:     (sH*sW*B, Hh, Wh, Cin)  phase-decomposed padded input (VMEM)
        # w_ref:     (K_pad, Cout)           im2col weight (rows >= KH*KW*Cin are 0)
        # b_ref:     (Cout, 1)
        # o_ref:     (Cout, M)               lane-dense output (one (8,128) vreg)
        # patch_ref: (M, K_pad)              staged im2col patch (VMEM scratch)

        # Zero once: keeps the K alignment-pad columns (and only them) exact.
        patch_ref[...] = jnp.zeros_like(patch_ref)

        for kh in range(KH):
            for kw in range(KW):
                t = kh * KW + kw
                base = ((kh % sH) * sW + (kw % sW)) * B
                # Contiguous slice only (phases absorb the stride): (B, OH, OW, Cin)
                x_tap = x_ref[pl.ds(base, B),
                              pl.ds(kh // sH, OH),
                              pl.ds(kw // sW, OW), :]
                # OW == sublane tile -> metadata-only collapse of leading dims;
                # store the (M, Cin) slab at its K offset in the patch.
                patch_ref[:, pl.ds(t * Cin, Cin)] = x_tap.reshape(M, Cin)

        # ONE MXU-native contraction: K on lanes of patch (LHS), on sublanes of
        # the weight (RHS) -> no operand transposes, f32 accumulation.
        res = lax.dot_general(patch_ref[...], w_ref[...],
                              (((1,), (0,)), ((), ())),
                              preferred_element_type=jnp.float32)      # (M, Cout)

        # XLU transpose to the lane-dense orientation; bias added once here.
        o_ref[...] = (res.T + b_ref[...]).astype(o_ref.dtype)

    return kernel


# ----------------------------------------------------------------------------
# PaddedConv builder: bind(weight, bias) -> forward(x)   (param prep hoisted)
# ----------------------------------------------------------------------------
def make_padded_conv(tensor_shape, out_channels, kernel_size, stride,
                     dilation=(1, 1)):
    assert tuple(dilation) == (1, 1)
    B, Cin, H, W = tensor_shape
    KH, KW = kernel_size
    sH, sW = stride
    Cout = out_channels

    sym_padding, unsym_padding = get_same_padding(
        tensor_shape, kernel_size, stride, dilation)
    # F.pad consumes the flat list with pairs applying from the LAST dim backwards,
    # so unsym_padding (built iterating spatial dims in (H, W) order) lands as
    # (W_lo, W_hi, H_lo, H_hi).  This unpacking reproduces the PyTorch module
    # exactly, including the H/W cross-over it implies for non-square inputs.
    w_lo, w_hi, h_lo, h_hi = unsym_padding
    ph, pw = sym_padding

    Hp = H + h_lo + h_hi + 2 * ph
    Wp = W + w_lo + w_hi + 2 * pw
    OH = (Hp - KH) // sH + 1
    OW = (Wp - KW) // sW + 1
    M = B * OH * OW
    K = KH * KW * Cin
    K_pad = -(-K // 8) * 8                     # sublane-aligned contraction length

    # Extra (never-read) zero pad so Hp/Wp are stride multiples -> the stride-s
    # tap gather becomes a contiguous slice of the phase-decomposed input.
    Hp_e = -(-Hp // sH) * sH
    Wp_e = -(-Wp // sW) * sW
    Hh, Wh = Hp_e // sH, Wp_e // sW

    kernel = _make_conv_kernel(B=B, Cin=Cin, Cout=Cout, KH=KH, KW=KW,
                               sH=sH, sW=sW, OH=OH, OW=OW, K_pad=K_pad)

    cost = pl.CostEstimate(
        flops=2 * M * Cout * K,
        transcendentals=0,
        bytes_accessed=4 * (sH * sW * B * Hh * Wh * Cin
                            + K_pad * Cout + Cout + Cout * M),
    )

    conv_fused = pl.pallas_call(
        kernel,
        out_shape=jax.ShapeDtypeStruct((Cout, M), jnp.float32),
        grid_spec=pltpu.PrefetchScalarGridSpec(
            num_scalar_prefetch=0,
            grid=(1,),
            in_specs=[
                pl.BlockSpec((sH * sW * B, Hh, Wh, Cin), lambda i: (0, 0, 0, 0)),
                pl.BlockSpec((K_pad, Cout), lambda i: (0, 0)),
                pl.BlockSpec((Cout, 1), lambda i: (0, 0)),
            ],
            out_specs=pl.BlockSpec((Cout, M), lambda i: (0, 0)),
            scratch_shapes=[pltpu.VMEM((M, K_pad), jnp.float32)],
        ),
        compiler_params=pltpu.CompilerParams(
            dimension_semantics=("arbitrary",),
            # Let XLA fuse the pad/reshape/transpose producer chain of operand 0
            # into the pallas_call operand instead of materializing tiny HLOs.
            allow_input_fusion=[True, False, False],
        ),
        cost_estimate=cost,
    )

    def bind(weight, bias):
        """One-time parameter prep (hoisted out of the per-call path)."""
        # weight (Cout, Cin, KH, KW) -> (KH, KW, Cin, Cout) -> (K, Cout), row order
        # t*Cin + c with t = kh*KW + kw; zero-pad rows to K_pad.
        w_mat = jnp.transpose(weight, (2, 3, 1, 0)).reshape(K, Cout)
        w_mat = jnp.pad(w_mat, ((0, K_pad - K), (0, 0)))
        b_col = bias.reshape(Cout, 1)

        @jax.jit
        def forward(x_nchw):
            # SAME padding (F.pad + conv.padding) plus the harmless alignment pad.
            x_pad = jnp.pad(
                x_nchw,
                ((0, 0), (0, 0),
                 (h_lo + ph, h_hi + ph + (Hp_e - Hp)),
                 (w_lo + pw, w_hi + pw + (Wp_e - Wp))))
            # NCHW -> stride-phase split (channels-last): (sH*sW*B, Hh, Wh, Cin)
            x_ph = x_pad.reshape(B, Cin, Hh, sH, Wh, sW)
            x_ph = jnp.transpose(x_ph, (3, 5, 0, 2, 4, 1))   # (sH, sW, B, Hh, Wh, Cin)
            x_ph = x_ph.reshape(sH * sW * B, Hh, Wh, Cin)

            out = conv_fused(x_ph, w_mat, b_col)              # (Cout, M) lane-dense
            # NCHW for module-faithful output (a channels-last consumer could take
            # the (Cout, M) slab directly and skip this lane-sparse transpose).
            out = out.reshape(Cout, B, OH, OW)
            return jnp.transpose(out, (1, 0, 2, 3))

        return forward

    return bind, (sym_padding, unsym_padding, OH, OW)


if __name__ == "__main__":
    # Module configuration
    B, Cin, H, W = 2, 4, 16, 16
    Cout, KH, KW = 8, 3, 3
    stride = (2, 2)

    bind, (sym_padding, unsym_padding, OH, OW) = make_padded_conv(
        (B, Cin, H, W), Cout, (KH, KW), stride)

    # Deterministic parameter init (kaiming-uniform-like, as nn.Conv2d default)
    key = jax.random.PRNGKey(0)
    kx, kw_, kb = jax.random.split(key, 3)
    fan_in = Cin * KH * KW
    bound = 1.0 / np.sqrt(fan_in)
    x = jax.random.normal(kx, (B, Cin, H, W), dtype=jnp.float32)
    weight = jax.random.uniform(
        kw_, (Cout, Cin, KH, KW), minval=-bound, maxval=bound, dtype=jnp.float32)
    bias = jax.random.uniform(
        kb, (Cout,), minval=-bound, maxval=bound, dtype=jnp.float32)

    forward = bind(weight, bias)           # param prep happens once, here
    out = jax.block_until_ready(forward(x))

    # Sanity check against XLA's conv (same SAME-padding arrangement)
    w_lo, w_hi, h_lo, h_hi = unsym_padding
    ph, pw = sym_padding
    ref = lax.conv_general_dilated(
        x, weight, window_strides=stride,
        padding=((h_lo + ph, h_hi + ph), (w_lo + pw, w_hi + pw)),
        dimension_numbers=("NCHW", "OIHW", "NCHW"),
    ) + bias.reshape(1, Cout, 1, 1)
    ref = jax.block_until_ready(ref)

    assert out.shape == (B, Cout, H // stride[0], W // stride[1]), out.shape
    err = float(np.max(np.abs(np.asarray(out) - np.asarray(ref))))
    assert np.allclose(np.asarray(out), np.asarray(ref), atol=1e-4, rtol=1e-4), err
    print("KERNEL_OK")
</pallas_src>

<mosaic_0001>
module attributes {stable_mosaic.version = 11 : i64} {
  func.func @kernel(%arg0: i32, %arg1: memref<8x9x9x4xf32, #tpu.memory_space<vmem>>, %arg2: memref<40x8xf32, #tpu.memory_space<vmem>>, %arg3: memref<8x1xf32, #tpu.memory_space<vmem>>, %arg4: memref<8x128xf32, #tpu.memory_space<vmem>>, %arg5: memref<128x40xf32, #tpu.memory_space<vmem>>) attributes {dimension_semantics = [#tpu.dimension_semantics<arbitrary>], iteration_bounds = array<i64: 1>, scalar_prefetch = 0 : i64, scratch_operands = 1 : i64, tpu.core_type = #tpu.core_type<tc>, window_params = [{pipeline_mode = #tpu.pipeline_mode<synchronous>, transform_indices = @transform_0, window_bounds = array<i64: 8, 9, 9, 4>}, {pipeline_mode = #tpu.pipeline_mode<synchronous>, transform_indices = @transform_1, window_bounds = array<i64: 40, 8>}, {pipeline_mode = #tpu.pipeline_mode<synchronous>, transform_indices = @transform_2, window_bounds = array<i64: 8, 1>}, {pipeline_mode = #tpu.pipeline_mode<synchronous>, transform_indices = @transform_3, window_bounds = array<i64: 8, 128>}]} {
    %cst = arith.constant 0.000000e+00 : f32
    %0 = vector.broadcast %cst : f32 to vector<128x40xf32>
    %c0 = arith.constant 0 : index
    %c0_0 = arith.constant 0 : index
    %1 = vector.load %arg5[%c0, %c0_0] : memref<128x40xf32, #tpu.memory_space<vmem>>, vector<128x40xf32>
    tpu.vector_store %arg5[%c0, %c0_0], %0 {strides = array<i32>} : memref<128x40xf32, #tpu.memory_space<vmem>>, vector<128x40xf32>,
    %c0_1 = arith.constant 0 : index
    %c0_2 = arith.constant 0 : index
    %c0_3 = arith.constant 0 : index
    %c0_4 = arith.constant 0 : index
    %2 = vector.load %arg1[%c0_1, %c0_2, %c0_3, %c0_4] : memref<8x9x9x4xf32, #tpu.memory_space<vmem>>, vector<2x8x8x4xf32>
    %3 = vector.shape_cast %2 : vector<2x8x8x4xf32> to vector<128x4xf32>
    %c0_5 = arith.constant 0 : index
    %c0_6 = arith.constant 0 : index
    %4 = vector.load %arg5[%c0_5, %c0_6] : memref<128x40xf32, #tpu.memory_space<vmem>>, vector<128x4xf32>
    tpu.vector_store %arg5[%c0_5, %c0_6], %3 {strides = array<i32>} : memref<128x40xf32, #tpu.memory_space<vmem>>, vector<128x4xf32>,
    %c2 = arith.constant 2 : index
    %c0_7 = arith.constant 0 : index
    %c0_8 = arith.constant 0 : index
    %c0_9 = arith.constant 0 : index
    %5 = vector.load %arg1[%c2, %c0_7, %c0_8, %c0_9] : memref<8x9x9x4xf32, #tpu.memory_space<vmem>>, vector<2x8x8x4xf32>
    %6 = vector.shape_cast %5 : vector<2x8x8x4xf32> to vector<128x4xf32>
    %c0_10 = arith.constant 0 : index
    %c4 = arith.constant 4 : index
    %7 = vector.load %arg5[%c0_10, %c4] : memref<128x40xf32, #tpu.memory_space<vmem>>, vector<128x4xf32>
    tpu.vector_store %arg5[%c0_10, %c4], %6 {strides = array<i32>} : memref<128x40xf32, #tpu.memory_space<vmem>>, vector<128x4xf32>,
    %c0_11 = arith.constant 0 : index
    %c0_12 = arith.constant 0 : index
    %c1 = arith.constant 1 : index
    %c0_13 = arith.constant 0 : index
    %8 = vector.load %arg1[%c0_11, %c0_12, %c1, %c0_13] : memref<8x9x9x4xf32, #tpu.memory_space<vmem>>, vector<2x8x8x4xf32>
    %9 = vector.shape_cast %8 : vector<2x8x8x4xf32> to vector<128x4xf32>
    %c0_14 = arith.constant 0 : index
    %c8 = arith.constant 8 : index
    %10 = vector.load %arg5[%c0_14, %c8] : memref<128x40xf32, #tpu.memory_space<vmem>>, vector<128x4xf32>
    tpu.vector_store %arg5[%c0_14, %c8], %9 {strides = array<i32>} : memref<128x40xf32, #tpu.memory_space<vmem>>, vector<128x4xf32>,
    %c4_15 = arith.constant 4 : index
    %c0_16 = arith.constant 0 : index
    %c0_17 = arith.constant 0 : index
    %c0_18 = arith.constant 0 : index
    %11 = vector.load %arg1[%c4_15, %c0_16, %c0_17, %c0_18] : memref<8x9x9x4xf32, #tpu.memory_space<vmem>>, vector<2x8x8x4xf32>
    %12 = vector.shape_cast %11 : vector<2x8x8x4xf32> to vector<128x4xf32>
    %c0_19 = arith.constant 0 : index
    %c12 = arith.constant 12 : index
    %13 = vector.load %arg5[%c0_19, %c12] : memref<128x40xf32, #tpu.memory_space<vmem>>, vector<128x4xf32>
    tpu.vector_store %arg5[%c0_19, %c12], %12 {strides = array<i32>} : memref<128x40xf32, #tpu.memory_space<vmem>>, vector<128x4xf32>,
    %c6 = arith.constant 6 : index
    %c0_20 = arith.constant 0 : index
    %c0_21 = arith.constant 0 : index
    %c0_22 = arith.constant 0 : index
    %14 = vector.load %arg1[%c6, %c0_20, %c0_21, %c0_22] : memref<8x9x9x4xf32, #tpu.memory_space<vmem>>, vector<2x8x8x4xf32>
    %15 = vector.shape_cast %14 : vector<2x8x8x4xf32> to vector<128x4xf32>
    %c0_23 = arith.constant 0 : index
    %c16 = arith.constant 16 : index
    %16 = vector.load %arg5[%c0_23, %c16] : memref<128x40xf32, #tpu.memory_space<vmem>>, vector<128x4xf32>
    tpu.vector_store %arg5[%c0_23, %c16], %15 {strides = array<i32>} : memref<128x40xf32, #tpu.memory_space<vmem>>, vector<128x4xf32>,
    %c4_24 = arith.constant 4 : index
    %c0_25 = arith.constant 0 : index
    %c1_26 = arith.constant 1 : index
    %c0_27 = arith.constant 0 : index
    %17 = vector.load %arg1[%c4_24, %c0_25, %c1_26, %c0_27] : memref<8x9x9x4xf32, #tpu.memory_space<vmem>>, vector<2x8x8x4xf32>
    %18 = vector.shape_cast %17 : vector<2x8x8x4xf32> to vector<128x4xf32>
    %c0_28 = arith.constant 0 : index
    %c20 = arith.constant 20 : index
    %19 = vector.load %arg5[%c0_28, %c20] : memref<128x40xf32, #tpu.memory_space<vmem>>, vector<128x4xf32>
    tpu.vector_store %arg5[%c0_28, %c20], %18 {strides = array<i32>} : memref<128x40xf32, #tpu.memory_space<vmem>>, vector<128x4xf32>,
    %c0_29 = arith.constant 0 : index
    %c1_30 = arith.constant 1 : index
    %c0_31 = arith.constant 0 : index
    %c0_32 = arith.constant 0 : index
    %20 = vector.load %arg1[%c0_29, %c1_30, %c0_31, %c0_32] : memref<8x9x9x4xf32, #tpu.memory_space<vmem>>, vector<2x8x8x4xf32>
    %21 = vector.shape_cast %20 : vector<2x8x8x4xf32> to vector<128x4xf32>
    %c0_33 = arith.constant 0 : index
    %c24 = arith.constant 24 : index
    %22 = vector.load %arg5[%c0_33, %c24] : memref<128x40xf32, #tpu.memory_space<vmem>>, vector<128x4xf32>
    tpu.vector_store %arg5[%c0_33, %c24], %21 {strides = array<i32>} : memref<128x40xf32, #tpu.memory_space<vmem>>, vector<128x4xf32>,
    %c2_34 = arith.constant 2 : index
    %c1_35 = arith.constant 1 : index
    %c0_36 = arith.constant 0 : index
    %c0_37 = arith.constant 0 : index
    %23 = vector.load %arg1[%c2_34, %c1_35, %c0_36, %c0_37] : memref<8x9x9x4xf32, #tpu.memory_space<vmem>>, vector<2x8x8x4xf32>
    %24 = vector.shape_cast %23 : vector<2x8x8x4xf32> to vector<128x4xf32>
    %c0_38 = arith.constant 0 : index
    %c28 = arith.constant 28 : index
    %25 = vector.load %arg5[%c0_38, %c28] : memref<128x40xf32, #tpu.memory_space<vmem>>, vector<128x4xf32>
    tpu.vector_store %arg5[%c0_38, %c28], %24 {strides = array<i32>} : memref<128x40xf32, #tpu.memory_space<vmem>>, vector<128x4xf32>,
    %c0_39 = arith.constant 0 : index
    %c1_40 = arith.constant 1 : index
    %c1_41 = arith.constant 1 : index
    %c0_42 = arith.constant 0 : index
    %26 = vector.load %arg1[%c0_39, %c1_40, %c1_41, %c0_42] : memref<8x9x9x4xf32, #tpu.memory_space<vmem>>, vector<2x8x8x4xf32>
    %27 = vector.shape_cast %26 : vector<2x8x8x4xf32> to vector<128x4xf32>
    %c0_43 = arith.constant 0 : index
    %c32 = arith.constant 32 : index
    %28 = vector.load %arg5[%c0_43, %c32] : memref<128x40xf32, #tpu.memory_space<vmem>>, vector<128x4xf32>
    tpu.vector_store %arg5[%c0_43, %c32], %27 {strides = array<i32>} : memref<128x40xf32, #tpu.memory_space<vmem>>, vector<128x4xf32>,
    %c0_44 = arith.constant 0 : index
    %c0_45 = arith.constant 0 : index
    %29 = vector.load %arg5[%c0_44, %c0_45] : memref<128x40xf32, #tpu.memory_space<vmem>>, vector<128x40xf32>
    %c0_46 = arith.constant 0 : index
    %c0_47 = arith.constant 0 : index
    %30 = vector.load %arg2[%c0_46, %c0_47] : memref<40x8xf32, #tpu.memory_space<vmem>>, vector<40x8xf32>
    %cst_48 = arith.constant dense<0.000000e+00> : vector<128x8xf32>
    %31 = tpu.matmul %29, %30, %cst_48 {dimension_numbers = #tpu.dot_dimension_numbers<[1], [0], [0], [1], [0, 0, 1, 1], [], []>} : vector<128x40xf32>, vector<40x8xf32>, vector<128x8xf32> -> vector<128x8xf32>
    %32 = tpu.transpose %31, [1, 0] : vector<128x8xf32> -> vector<8x128xf32>
    %c0_49 = arith.constant 0 : index
    %c0_50 = arith.constant 0 : index
    %33 = vector.load %arg3[%c0_49, %c0_50] : memref<8x1xf32, #tpu.memory_space<vmem>>, vector<8x1xf32>
    %34 = vector.broadcast %33 : vector<8x1xf32> to vector<8x128xf32>
    %35 = arith.addf %32, %34 : vector<8x128xf32>
    %c0_51 = arith.constant 0 : index
    %c0_52 = arith.constant 0 : index
    %36 = vector.load %arg4[%c0_51, %c0_52] : memref<8x128xf32, #tpu.memory_space<vmem>>, vector<8x128xf32>
    tpu.vector_store %arg4[%c0_51, %c0_52], %35 {strides = array<i32>} : memref<8x128xf32, #tpu.memory_space<vmem>>, vector<8x128xf32>,
    return
  }
  func.func @transform_0(%arg0: i32) -> (i32, i32, i32, i32) {
    %c0_i32 = arith.constant 0 : i32
    %c0_i32_0 = arith.constant 0 : i32
    %c0_i32_1 = arith.constant 0 : i32
    %c0_i32_2 = arith.constant 0 : i32
    %c0_i32_3 = arith.constant 0 : i32
    return %c0_i32, %c0_i32_0, %c0_i32_1, %c0_i32_2 : i32, i32, i32, i32
  }
  func.func @transform_1(%arg0: i32) -> (i32, i32) {
    %c0_i32 = arith.constant 0 : i32
    %c0_i32_0 = arith.constant 0 : i32
    %c0_i32_1 = arith.constant 0 : i32
    return %c0_i32, %c0_i32_0 : i32, i32
  }
  func.func @transform_2(%arg0: i32) -> (i32, i32) {
    %c0_i32 = arith.constant 0 : i32
    %c0_i32_0 = arith.constant 0 : i32
    %c0_i32_1 = arith.constant 0 : i32
    return %c0_i32, %c0_i32_0 : i32, i32
  }
  func.func @transform_3(%arg0: i32) -> (i32, i32) {
    %c0_i32 = arith.constant 0 : i32
    %c0_i32_0 = arith.constant 0 : i32
    %c0_i32_1 = arith.constant 0 : i32
    return %c0_i32, %c0_i32_0 : i32, i32
  }
}

</mosaic_0001>

<llo_original>
// kernel: forward.1
$region0: #{forward.1}
  #allocation0 [shape = 'u32[]', space=smem, size = 0x4, offset = 0x4, fixed_abs, tag = 'smem constant byte address 0x4 - core index']
  #allocation1 [shape = 'u32[72,128]{1,0:T(1,128)}', space=vmem, size = 0x9000, scoped, tag = 'internal scratch']
  #allocation2 [shape = 'f32[128,40]{1,0:T(8,128)}', space=vmem, size = 0x10000, scoped, tag = 'scratch operand']
  %s0 = inlined_call_operand.vmem [shape: f32[8,9,9,4], index: 0, kind: input, shape index: {}]
  %s1 = inlined_call_operand.vmem [shape: f32[40,8], index: 1, kind: input, shape index: {}]
  %s2 = inlined_call_operand.vmem [shape: f32[8,1], index: 2, kind: input, shape index: {}]
  %s3 = inlined_call_operand.vmem [shape: f32[8,128], index: 3, kind: output, shape index: {}]
  %s4 = sld [smem:[#allocation0]]
  $region22: #{forward.1} parent=0
    _
  %s6 = ssub.s32 1, %s4
  %s7 = scalar_select 0, %s6, %s4
  // Predicated region
  $region2: #{forward.1} parent=0 // pred_check
    _
  $region3: #{forward.1} parent=0 // pred_check_branch
    %9 = sbr.rel (0) target = $region5
  $region4: #{forward.1} parent=0 // pred_region
    _
  $region5: #{forward.1} parent=0 // pred_fallthru
    _
  // Predicated region
  $region6: #{forward.1} parent=0 // pred_check
    _
  $region7: #{forward.1} parent=0 // pred_check_branch
    %11 = sbr.rel (0) target = $region9
  $region8: #{forward.1} parent=0 // pred_region
    _
  $region9: #{forward.1} parent=0 // pred_fallthru
    _
  // Predicated region
  $region10: #{forward.1} parent=0 // pred_check
    _
  $region11: #{forward.1} parent=0 // pred_check_branch
    %13 = sbr.rel (0) target = $region13
  $region12: #{forward.1} parent=0 // pred_region
    _
  $region13: #{forward.1} parent=0 // pred_fallthru
    _
  %vm14 = vcmask 326656
  %15 = vst.msk [vmem:[#allocation2] sm:$0xff] %vm14, 0.0
  %16 = vst.msk [vmem:[#allocation2 + $0x8] sm:$0xff] %vm14, 0.0
  %17 = vst.msk [vmem:[#allocation2 + $0x10] sm:$0xff] %vm14, 0.0
  %18 = vst.msk [vmem:[#allocation2 + $0x18] sm:$0xff] %vm14, 0.0
  %19 = vst.msk [vmem:[#allocation2 + $0x20] sm:$0xff] %vm14, 0.0
  %20 = vst.msk [vmem:[#allocation2 + $0x28] sm:$0xff] %vm14, 0.0
  %21 = vst.msk [vmem:[#allocation2 + $0x30] sm:$0xff] %vm14, 0.0
  %22 = vst.msk [vmem:[#allocation2 + $0x38] sm:$0xff] %vm14, 0.0
  %23 = vst.msk [vmem:[#allocation2 + $0x40] sm:$0xff] %vm14, 0.0
  %24 = vst.msk [vmem:[#allocation2 + $0x48] sm:$0xff] %vm14, 0.0
  %25 = vst.msk [vmem:[#allocation2 + $0x50] sm:$0xff] %vm14, 0.0
  %26 = vst.msk [vmem:[#allocation2 + $0x58] sm:$0xff] %vm14, 0.0
  %27 = vst.msk [vmem:[#allocation2 + $0x60] sm:$0xff] %vm14, 0.0
  %28 = vst.msk [vmem:[#allocation2 + $0x68] sm:$0xff] %vm14, 0.0
  %29 = vst.msk [vmem:[#allocation2 + $0x70] sm:$0xff] %vm14, 0.0
  %30 = vst.msk [vmem:[#allocation2 + $0x78] sm:$0xff] %vm14, 0.0
  %v31 = vld [vmem:[%s0] sm:$0xff]
  %v32 = vld [vmem:[%s0 + $0x10] sm:$0xff]
  %v33 = vld [vmem:[%s0 + $0x20] sm:$0xff]
  %v34 = vld [vmem:[%s0 + $0x30] sm:$0xff]
  %v35 = vld [vmem:[%s0 + $0x40] sm:$0xff]
  %v36 = vld [vmem:[%s0 + $0x50] sm:$0xff]
  %v37 = vld [vmem:[%s0 + $0x60] sm:$0xff]
  %v38 = vld [vmem:[%s0 + $0x70] sm:$0xff]
  %v39 = vld [vmem:[%s0 + $0x90] sm:$0xff]
  %v40 = vld [vmem:[%s0 + $0xa0] sm:$0xff]
  %v41 = vld [vmem:[%s0 + $0xb0] sm:$0xff]
  %v42 = vld [vmem:[%s0 + $0xc0] sm:$0xff]
  %v43 = vld [vmem:[%s0 + $0xd0] sm:$0xff]
  %v44 = vld [vmem:[%s0 + $0xe0] sm:$0xff]
  %v45 = vld [vmem:[%s0 + $0xf0] sm:$0xff]
  %v46 = vld [vmem:[%s0 + $0x100] sm:$0xff]
  %vm47 = vcmask 31744
  %48 = vst.msk [vmem:[#allocation2] sm:$0xff] %vm47, %v31
  %49 = vst.msk [vmem:[#allocation2 + $0x8] sm:$0xff] %vm47, %v32
  %50 = vst.msk [vmem:[#allocation2 + $0x10] sm:$0xff] %vm47, %v33
  %51 = vst.msk [vmem:[#allocation2 + $0x18] sm:$0xff] %vm47, %v34
  %52 = vst.msk [vmem:[#allocation2 + $0x20] sm:$0xff] %vm47, %v35
  %53 = vst.msk [vmem:[#allocation2 + $0x28] sm:$0xff] %vm47, %v36
  %54 = vst.msk [vmem:[#allocation2 + $0x30] sm:$0xff] %vm47, %v37
  %55 = vst.msk [vmem:[#allocation2 + $0x38] sm:$0xff] %vm47, %v38
  %56 = vst.msk [vmem:[#allocation2 + $0x40] sm:$0xff] %vm47, %v39
  %57 = vst.msk [vmem:[#allocation2 + $0x48] sm:$0xff] %vm47, %v40
  %58 = vst.msk [vmem:[#allocation2 + $0x50] sm:$0xff] %vm47, %v41
  %59 = vst.msk [vmem:[#allocation2 + $0x58] sm:$0xff] %vm47, %v42
  %60 = vst.msk [vmem:[#allocation2 + $0x60] sm:$0xff] %vm47, %v43
  %61 = vst.msk [vmem:[#allocation2 + $0x68] sm:$0xff] %vm47, %v44
  %62 = vst.msk [vmem:[#allocation2 + $0x70] sm:$0xff] %vm47, %v45
  %63 = vst.msk [vmem:[#allocation2 + $0x78] sm:$0xff] %vm47, %v46
  %s64 = scalar_lea.vmem %s0, 288
  %v65 = vld [vmem:[%s64] sm:$0xff]
  %v66 = vld [vmem:[%s64 + $0x10] sm:$0xff]
  %v67 = vld [vmem:[%s64 + $0x20] sm:$0xff]
  %v68 = vld [vmem:[%s64 + $0x30] sm:$0xff]
  %v69 = vld [vmem:[%s64 + $0x40] sm:$0xff]
  %v70 = vld [vmem:[%s64 + $0x50] sm:$0xff]
  %v71 = vld [vmem:[%s64 + $0x60] sm:$0xff]
  %v72 = vld [vmem:[%s64 + $0x70] sm:$0xff]
  %v73 = vld [vmem:[%s64 + $0x90] sm:$0xff]
  %v74 = vld [vmem:[%s64 + $0xa0] sm:$0xff]
  %v75 = vld [vmem:[%s64 + $0xb0] sm:$0xff]
  %v76 = vld [vmem:[%s64 + $0xc0] sm:$0xff]
  %v77 = vld [vmem:[%s64 + $0xd0] sm:$0xff]
  %v78 = vld [vmem:[%s64 + $0xe0] sm:$0xff]
  %v79 = vld [vmem:[%s64 + $0xf0] sm:$0xff]
  %v80 = vld [vmem:[%s64 + $0x100] sm:$0xff]
  %97 = vrot.lane.b32.xlu0 %v65, 4
  %v98 = vpop.permute.xlu0 %97
  %99 = vrot.lane.b32.xlu0 %v66, 4
  %v100 = vpop.permute.xlu0 %99
  %101 = vrot.lane.b32.xlu0 %v67, 4
  %v102 = vpop.permute.xlu0 %101
  %103 = vrot.lane.b32.xlu0 %v68, 4
  %v104 = vpop.permute.xlu0 %103
  %105 = vrot.lane.b32.xlu0 %v69, 4
  %v106 = vpop.permute.xlu0 %105
  %107 = vrot.lane.b32.xlu0 %v70, 4
  %v108 = vpop.permute.xlu0 %107
  %109 = vrot.lane.b32.xlu0 %v71, 4
  %v110 = vpop.permute.xlu0 %109
  %111 = vrot.lane.b32.xlu0 %v72, 4
  %v112 = vpop.permute.xlu0 %111
  %113 = vrot.lane.b32.xlu0 %v73, 4
  %v114 = vpop.permute.xlu0 %113
  %115 = vrot.lane.b32.xlu0 %v74, 4
  %v116 = vpop.permute.xlu0 %115
  %117 = vrot.lane.b32.xlu0 %v75, 4
  %v118 = vpop.permute.xlu0 %117
  %119 = vrot.lane.b32.xlu0 %v76, 4
  %v120 = vpop.permute.xlu0 %119
  %121 = vrot.lane.b32.xlu0 %v77, 4
  %v122 = vpop.permute.xlu0 %121
  %123 = vrot.lane.b32.xlu0 %v78, 4
  %v124 = vpop.permute.xlu0 %123
  %125 = vrot.lane.b32.xlu0 %v79, 4
  %v126 = vpop.permute.xlu0 %125
  %127 = vrot.lane.b32.xlu0 %v80, 4
  %v128 = vpop.permute.xlu0 %127
  %vm145 = vcmask 64544
  %146 = vst.msk [vmem:[#allocation2] sm:$0xff] %vm145, %v98
  %147 = vst.msk [vmem:[#allocation2 + $0x8] sm:$0xff] %vm145, %v100
  %148 = vst.msk [vmem:[#allocation2 + $0x10] sm:$0xff] %vm145, %v102
  %149 = vst.msk [vmem:[#allocation2 + $0x18] sm:$0xff] %vm145, %v104
  %150 = vst.msk [vmem:[#allocation2 + $0x20] sm:$0xff] %vm145, %v106
  %151 = vst.msk [vmem:[#allocation2 + $0x28] sm:$0xff] %vm145, %v108
  %152 = vst.msk [vmem:[#allocation2 + $0x30] sm:$0xff] %vm145, %v110
  %153 = vst.msk [vmem:[#allocation2 + $0x38] sm:$0xff] %vm145, %v112
  %154 = vst.msk [vmem:[#allocation2 + $0x40] sm:$0xff] %vm145, %v114
  %155 = vst.msk [vmem:[#allocation2 + $0x48] sm:$0xff] %vm145, %v116
  %156 = vst.msk [vmem:[#allocation2 + $0x50] sm:$0xff] %vm145, %v118
  %157 = vst.msk [vmem:[#allocation2 + $0x58] sm:$0xff] %vm145, %v120
  %158 = vst.msk [vmem:[#allocation2 + $0x60] sm:$0xff] %vm145, %v122
  %159 = vst.msk [vmem:[#allocation2 + $0x68] sm:$0xff] %vm145, %v124
  %160 = vst.msk [vmem:[#allocation2 + $0x70] sm:$0xff] %vm145, %v126
  %161 = vst.msk [vmem:[#allocation2 + $0x78] sm:$0xff] %vm145, %v128
  %v162 = vld [vmem:[%s0 + $0x1] sm:$0xff]
  %v163 = vld [vmem:[%s0 + $0x11] sm:$0xff]
  %v164 = vld [vmem:[%s0 + $0x21] sm:$0xff]
  %v165 = vld [vmem:[%s0 + $0x31] sm:$0xff]
  %v166 = vld [vmem:[%s0 + $0x41] sm:$0xff]
  %v167 = vld [vmem:[%s0 + $0x51] sm:$0xff]
  %v168 = vld [vmem:[%s0 + $0x61] sm:$0xff]
  %v169 = vld [vmem:[%s0 + $0x71] sm:$0xff]
  %v170 = vld [vmem:[%s0 + $0x91] sm:$0xff]
  %v171 = vld [vmem:[%s0 + $0xa1] sm:$0xff]
  %v172 = vld [vmem:[%s0 + $0xb1] sm:$0xff]
  %v173 = vld [vmem:[%s0 + $0xc1] sm:$0xff]
  %v174 = vld [vmem:[%s0 + $0xd1] sm:$0xff]
  %v175 = vld [vmem:[%s0 + $0xe1] sm:$0xff]
  %v176 = vld [vmem:[%s0 + $0xf1] sm:$0xff]
  %v177 = vld [vmem:[%s0 + $0x101] sm:$0xff]
  %194 = vrot.lane.b32.xlu0 %v162, 8
  %v195 = vpop.permute.xlu0 %194
  %196 = vrot.lane.b32.xlu0 %v163, 8
  %v197 = vpop.permute.xlu0 %196
  %198 = vrot.lane.b32.xlu0 %v164, 8
  %v199 = vpop.permute.xlu0 %198
  %200 = vrot.lane.b32.xlu0 %v165, 8
  %v201 = vpop.permute.xlu0 %200
  %202 = vrot.lane.b32.xlu0 %v166, 8
  %v203 = vpop.permute.xlu0 %202
  %204 = vrot.lane.b32.xlu0 %v167, 8
  %v205 = vpop.permute.xlu0 %204
  %206 = vrot.lane.b32.xlu0 %v168, 8
  %v207 = vpop.permute.xlu0 %206
  %208 = vrot.lane.b32.xlu0 %v169, 8
  %v209 = vpop.permute.xlu0 %208
  %210 = vrot.lane.b32.xlu0 %v170, 8
  %v211 = vpop.permute.xlu0 %210
  %212 = vrot.lane.b32.xlu0 %v171, 8
  %v213 = vpop.permute.xlu0 %212
  %214 = vrot.lane.b32.xlu0 %v172, 8
  %v215 = vpop.permute.xlu0 %214
  %216 = vrot.lane.b32.xlu0 %v173, 8
  %v217 = vpop.permute.xlu0 %216
  %218 = vrot.lane.b32.xlu0 %v174, 8
  %v219 = vpop.permute.xlu0 %218
  %220 = vrot.lane.b32.xlu0 %v175, 8
  %v221 = vpop.permute.xlu0 %220
  %222 = vrot.lane.b32.xlu0 %v176, 8
  %v223 = vpop.permute.xlu0 %222
  %224 = vrot.lane.b32.xlu0 %v177, 8
  %v225 = vpop.permute.xlu0 %224
  %vm242 = vcmask 97344
  %243 = vst.msk [vmem:[#allocation2] sm:$0xff] %vm242, %v195
  %244 = vst.msk [vmem:[#allocation2 + $0x8] sm:$0xff] %vm242, %v197
  %245 = vst.msk [vmem:[#allocation2 + $0x10] sm:$0xff] %vm242, %v199
  %246 = vst.msk [vmem:[#allocation2 + $0x18] sm:$0xff] %vm242, %v201
  %247 = vst.msk [vmem:[#allocation2 + $0x20] sm:$0xff] %vm242, %v203
  %248 = vst.msk [vmem:[#allocation2 + $0x28] sm:$0xff] %vm242, %v205
  %249 = vst.msk [vmem:[#allocation2 + $0x30] sm:$0xff] %vm242, %v207
  %250 = vst.msk [vmem:[#allocation2 + $0x38] sm:$0xff] %vm242, %v209
  %251 = vst.msk [vmem:[#allocation2 + $0x40] sm:$0xff] %vm242, %v211
  %252 = vst.msk [vmem:[#allocation2 + $0x48] sm:$0xff] %vm242, %v213
  %253 = vst.msk [vmem:[#allocation2 + $0x50] sm:$0xff] %vm242, %v215
  %254 = vst.msk [vmem:[#allocation2 + $0x58] sm:$0xff] %vm242, %v217
  %255 = vst.msk [vmem:[#allocation2 + $0x60] sm:$0xff] %vm242, %v219
  %256 = vst.msk [vmem:[#allocation2 + $0x68] sm:$0xff] %vm242, %v221
  %257 = vst.msk [vmem:[#allocation2 + $0x70] sm:$0xff] %vm242, %v223
  %258 = vst.msk [vmem:[#allocation2 + $0x78] sm:$0xff] %vm242, %v225
  %s259 = scalar_lea.vmem %s0, 576
  %v260 = vld [vmem:[%s259] sm:$0xff]
  %v261 = vld [vmem:[%s259 + $0x10] sm:$0xff]
  %v262 = vld [vmem:[%s259 + $0x20] sm:$0xff]
  %v263 = vld [vmem:[%s259 + $0x30] sm:$0xff]
  %v264 = vld [vmem:[%s259 + $0x40] sm:$0xff]
  %v265 = vld [vmem:[%s259 + $0x50] sm:$0xff]
  %v266 = vld [vmem:[%s259 + $0x60] sm:$0xff]
  %v267 = vld [vmem:[%s259 + $0x70] sm:$0xff]
  %v268 = vld [vmem:[%s259 + $0x90] sm:$0xff]
  %v269 = vld [vmem:[%s259 + $0xa0] sm:$0xff]
  %v270 = vld [vmem:[%s259 + $0xb0] sm:$0xff]
  %v271 = vld [vmem:[%s259 + $0xc0] sm:$0xff]
  %v272 = vld [vmem:[%s259 + $0xd0] sm:$0xff]
  %v273 = vld [vmem:[%s259 + $0xe0] sm:$0xff]
  %v274 = vld [vmem:[%s259 + $0xf0] sm:$0xff]
  %v275 = vld [vmem:[%s259 + $0x100] sm:$0xff]
  %292 = vrot.lane.b32.xlu0 %v260, 12
  %v293 = vpop.permute.xlu0 %292
  %294 = vrot.lane.b32.xlu0 %v261, 12
  %v295 = vpop.permute.xlu0 %294
  %296 = vrot.lane.b32.xlu0 %v262, 12
  %v297 = vpop.permute.xlu0 %296
  %298 = vrot.lane.b32.xlu0 %v263, 12
  %v299 = vpop.permute.xlu0 %298
  %300 = vrot.lane.b32.xlu0 %v264, 12
  %v301 = vpop.permute.xlu0 %300
  %302 = vrot.lane.b32.xlu0 %v265, 12
  %v303 = vpop.permute.xlu0 %302
  %304 = vrot.lane.b32.xlu0 %v266, 12
  %v305 = vpop.permute.xlu0 %304
  %306 = vrot.lane.b32.xlu0 %v267, 12
  %v307 = vpop.permute.xlu0 %306
  %308 = vrot.lane.b32.xlu0 %v268, 12
  %v309 = vpop.permute.xlu0 %308
  %310 = vrot.lane.b32.xlu0 %v269, 12
  %v311 = vpop.permute.xlu0 %310
  %312 = vrot.lane.b32.xlu0 %v270, 12
  %v313 = vpop.permute.xlu0 %312
  %314 = vrot.lane.b32.xlu0 %v271, 12
  %v315 = vpop.permute.xlu0 %314
  %316 = vrot.lane.b32.xlu0 %v272, 12
  %v317 = vpop.permute.xlu0 %316
  %318 = vrot.lane.b32.xlu0 %v273, 12
  %v319 = vpop.permute.xlu0 %318
  %320 = vrot.lane.b32.xlu0 %v274, 12
  %v321 = vpop.permute.xlu0 %320
  %322 = vrot.lane.b32.xlu0 %v275, 12
  %v323 = vpop.permute.xlu0 %322
  %vm340 = vcmask 130144
  %341 = vst.msk [vmem:[#allocation2] sm:$0xff] %vm340, %v293
  %342 = vst.msk [vmem:[#allocation2 + $0x8] sm:$0xff] %vm340, %v295
  %343 = vst.msk [vmem:[#allocation2 + $0x10] sm:$0xff] %vm340, %v297
  %344 = vst.msk [vmem:[#allocation2 + $0x18] sm:$0xff] %vm340, %v299
  %345 = vst.msk [vmem:[#allocation2 + $0x20] sm:$0xff] %vm340, %v301
  %346 = vst.msk [vmem:[#allocation2 + $0x28] sm:$0xff] %vm340, %v303
  %347 = vst.msk [vmem:[#allocation2 + $0x30] sm:$0xff] %vm340, %v305
  %348 = vst.msk [vmem:[#allocation2 + $0x38] sm:$0xff] %vm340, %v307
  %349 = vst.msk [vmem:[#allocation2 + $0x40] sm:$0xff] %vm340, %v309
  %350 = vst.msk [vmem:[#allocation2 + $0x48] sm:$0xff] %vm340, %v311
  %351 = vst.msk [vmem:[#allocation2 + $0x50] sm:$0xff] %vm340, %v313
  %352 = vst.msk [vmem:[#allocation2 + $0x58] sm:$0xff] %vm340, %v315
  %353 = vst.msk [vmem:[#allocation2 + $0x60] sm:$0xff] %vm340, %v317
  %354 = vst.msk [vmem:[#allocation2 + $0x68] sm:$0xff] %vm340, %v319
  %355 = vst.msk [vmem:[#allocation2 + $0x70] sm:$0xff] %vm340, %v321
  %356 = vst.msk [vmem:[#allocation2 + $0x78] sm:$0xff] %vm340, %v323
  %s357 = scalar_lea.vmem %s0, 864
  %v358 = vld [vmem:[%s357] sm:$0xff]
  %v359 = vld [vmem:[%s357 + $0x10] sm:$0xff]
  %v360 = vld [vmem:[%s357 + $0x20] sm:$0xff]
  %v361 = vld [vmem:[%s357 + $0x30] sm:$0xff]
  %v362 = vld [vmem:[%s357 + $0x40] sm:$0xff]
  %v363 = vld [vmem:[%s357 + $0x50] sm:$0xff]
  %v364 = vld [vmem:[%s357 + $0x60] sm:$0xff]
  %v365 = vld [vmem:[%s357 + $0x70] sm:$0xff]
  %v366 = vld [vmem:[%s357 + $0x90] sm:$0xff]
  %v367 = vld [vmem:[%s357 + $0xa0] sm:$0xff]
  %v368 = vld [vmem:[%s357 + $0xb0] sm:$0xff]
  %v369 = vld [vmem:[%s357 + $0xc0] sm:$0xff]
  %v370 = vld [vmem:[%s357 + $0xd0] sm:$0xff]
  %v371 = vld [vmem:[%s357 + $0xe0] sm:$0xff]
  %v372 = vld [vmem:[%s357 + $0xf0] sm:$0xff]
  %v373 = vld [vmem:[%s357 + $0x100] sm:$0xff]
  %390 = vrot.lane.b32.xlu0 %v358, 16
  %v391 = vpop.permute.xlu0 %390
  %392 = vrot.lane.b32.xlu0 %v359, 16
  %v393 = vpop.permute.xlu0 %392
  %394 = vrot.lane.b32.xlu0 %v360, 16
  %v395 = vpop.permute.xlu0 %394
  %396 = vrot.lane.b32.xlu0 %v361, 16
  %v397 = vpop.permute.xlu0 %396
  %398 = vrot.lane.b32.xlu0 %v362, 16
  %v399 = vpop.permute.xlu0 %398
  %400 = vrot.lane.b32.xlu0 %v363, 16
  %v401 = vpop.permute.xlu0 %400
  %402 = vrot.lane.b32.xlu0 %v364, 16
  %v403 = vpop.permute.xlu0 %402
  %404 = vrot.lane.b32.xlu0 %v365, 16
  %v405 = vpop.permute.xlu0 %404
  %406 = vrot.lane.b32.xlu0 %v366, 16
  %v407 = vpop.permute.xlu0 %406
  %408 = vrot.lane.b32.xlu0 %v367, 16
  %v409 = vpop.permute.xlu0 %408
  %410 = vrot.lane.b32.xlu0 %v368, 16
  %v411 = vpop.permute.xlu0 %410
  %412 = vrot.lane.b32.xlu0 %v369, 16
  %v413 = vpop.permute.xlu0 %412
  %414 = vrot.lane.b32.xlu0 %v370, 16
  %v415 = vpop.permute.xlu0 %414
  %416 = vrot.lane.b32.xlu0 %v371, 16
  %v417 = vpop.permute.xlu0 %416
  %418 = vrot.lane.b32.xlu0 %v372, 16
  %v419 = vpop.permute.xlu0 %418
  %420 = vrot.lane.b32.xlu0 %v373, 16
  %v421 = vpop.permute.xlu0 %420
  %vm438 = vcmask 162944
  %439 = vst.msk [vmem:[#allocation2] sm:$0xff] %vm438, %v391
  %440 = vst.msk [vmem:[#allocation2 + $0x8] sm:$0xff] %vm438, %v393
  %441 = vst.msk [vmem:[#allocation2 + $0x10] sm:$0xff] %vm438, %v395
  %442 = vst.msk [vmem:[#allocation2 + $0x18] sm:$0xff] %vm438, %v397
  %443 = vst.msk [vmem:[#allocation2 + $0x20] sm:$0xff] %vm438, %v399
  %444 = vst.msk [vmem:[#allocation2 + $0x28] sm:$0xff] %vm438, %v401
  %445 = vst.msk [vmem:[#allocation2 + $0x30] sm:$0xff] %vm438, %v403
  %446 = vst.msk [vmem:[#allocation2 + $0x38] sm:$0xff] %vm438, %v405
  %447 = vst.msk [vmem:[#allocation2 + $0x40] sm:$0xff] %vm438, %v407
  %448 = vst.msk [vmem:[#allocation2 + $0x48] sm:$0xff] %vm438, %v409
  %449 = vst.msk [vmem:[#allocation2 + $0x50] sm:$0xff] %vm438, %v411
  %450 = vst.msk [vmem:[#allocation2 + $0x58] sm:$0xff] %vm438, %v413
  %451 = vst.msk [vmem:[#allocation2 + $0x60] sm:$0xff] %vm438, %v415
  %452 = vst.msk [vmem:[#allocation2 + $0x68] sm:$0xff] %vm438, %v417
  %453 = vst.msk [vmem:[#allocation2 + $0x70] sm:$0xff] %vm438, %v419
  %454 = vst.msk [vmem:[#allocation2 + $0x78] sm:$0xff] %vm438, %v421
  %v455 = vld [vmem:[%s259 + $0x1] sm:$0xff]
  %v456 = vld [vmem:[%s259 + $0x11] sm:$0xff]
  %v457 = vld [vmem:[%s259 + $0x21] sm:$0xff]
  %v458 = vld [vmem:[%s259 + $0x31] sm:$0xff]
  %v459 = vld [vmem:[%s259 + $0x41] sm:$0xff]
  %v460 = vld [vmem:[%s259 + $0x51] sm:$0xff]
  %v461 = vld [vmem:[%s259 + $0x61] sm:$0xff]
  %v462 = vld [vmem:[%s259 + $0x71] sm:$0xff]
  %v463 = vld [vmem:[%s259 + $0x91] sm:$0xff]
  %v464 = vld [vmem:[%s259 + $0xa1] sm:$0xff]
  %v465 = vld [vmem:[%s259 + $0xb1] sm:$0xff]
  %v466 = vld [vmem:[%s259 + $0xc1] sm:$0xff]
  %v467 = vld [vmem:[%s259 + $0xd1] sm:$0xff]
  %v468 = vld [vmem:[%s259 + $0xe1] sm:$0xff]
  %v469 = vld [vmem:[%s259 + $0xf1] sm:$0xff]
  %v470 = vld [vmem:[%s259 + $0x101] sm:$0xff]
  %487 = vrot.lane.b32.xlu0 %v455, 20
  %v488 = vpop.permute.xlu0 %487
  %489 = vrot.lane.b32.xlu0 %v456, 20
  %v490 = vpop.permute.xlu0 %489
  %491 = vrot.lane.b32.xlu0 %v457, 20
  %v492 = vpop.permute.xlu0 %491
  %493 = vrot.lane.b32.xlu0 %v458, 20
  %v494 = vpop.permute.xlu0 %493
  %495 = vrot.lane.b32.xlu0 %v459, 20
  %v496 = vpop.permute.xlu0 %495
  %497 = vrot.lane.b32.xlu0 %v460, 20
  %v498 = vpop.permute.xlu0 %497
  %499 = vrot.lane.b32.xlu0 %v461, 20
  %v500 = vpop.permute.xlu0 %499
  %501 = vrot.lane.b32.xlu0 %v462, 20
  %v502 = vpop.permute.xlu0 %501
  %503 = vrot.lane.b32.xlu0 %v463, 20
  %v504 = vpop.permute.xlu0 %503
  %505 = vrot.lane.b32.xlu0 %v464, 20
  %v506 = vpop.permute.xlu0 %505
  %507 = vrot.lane.b32.xlu0 %v465, 20
  %v508 = vpop.permute.xlu0 %507
  %509 = vrot.lane.b32.xlu0 %v466, 20
  %v510 = vpop.permute.xlu0 %509
  %511 = vrot.lane.b32.xlu0 %v467, 20
  %v512 = vpop.permute.xlu0 %511
  %513 = vrot.lane.b32.xlu0 %v468, 20
  %v514 = vpop.permute.xlu0 %513
  %515 = vrot.lane.b32.xlu0 %v469, 20
  %v516 = vpop.permute.xlu0 %515
  %517 = vrot.lane.b32.xlu0 %v470, 20
  %v518 = vpop.permute.xlu0 %517
  %vm535 = vcmask 195744
  %536 = vst.msk [vmem:[#allocation2] sm:$0xff] %vm535, %v488
  %537 = vst.msk [vmem:[#allocation2 + $0x8] sm:$0xff] %vm535, %v490
  %538 = vst.msk [vmem:[#allocation2 + $0x10] sm:$0xff] %vm535, %v492
  %539 = vst.msk [vmem:[#allocation2 + $0x18] sm:$0xff] %vm535, %v494
  %540 = vst.msk [vmem:[#allocation2 + $0x20] sm:$0xff] %vm535, %v496
  %541 = vst.msk [vmem:[#allocation2 + $0x28] sm:$0xff] %vm535, %v498
  %542 = vst.msk [vmem:[#allocation2 + $0x30] sm:$0xff] %vm535, %v500
  %543 = vst.msk [vmem:[#allocation2 + $0x38] sm:$0xff] %vm535, %v502
  %544 = vst.msk [vmem:[#allocation2 + $0x40] sm:$0xff] %vm535, %v504
  %545 = vst.msk [vmem:[#allocation2 + $0x48] sm:$0xff] %vm535, %v506
  %546 = vst.msk [vmem:[#allocation2 + $0x50] sm:$0xff] %vm535, %v508
  %547 = vst.msk [vmem:[#allocation2 + $0x58] sm:$0xff] %vm535, %v510
  %548 = vst.msk [vmem:[#allocation2 + $0x60] sm:$0xff] %vm535, %v512
  %549 = vst.msk [vmem:[#allocation2 + $0x68] sm:$0xff] %vm535, %v514
  %550 = vst.msk [vmem:[#allocation2 + $0x70] sm:$0xff] %vm535, %v516
  %551 = vst.msk [vmem:[#allocation2 + $0x78] sm:$0xff] %vm535, %v518
  %s552 = scalar_lea.vmem %s0, 16
  %v553 = vld [vmem:[%s552] sm:$0xff]
  %v554 = vld [vmem:[%s552 + $0x10] sm:$0xff]
  %v555 = vld [vmem:[%s552 + $0x20] sm:$0xff]
  %v556 = vld [vmem:[%s552 + $0x30] sm:$0xff]
  %v557 = vld [vmem:[%s552 + $0x40] sm:$0xff]
  %v558 = vld [vmem:[%s552 + $0x50] sm:$0xff]
  %v559 = vld [vmem:[%s552 + $0x60] sm:$0xff]
  %v560 = vld [vmem:[%s552 + $0x70] sm:$0xff]
  %v561 = vld [vmem:[%s552 + $0x90] sm:$0xff]
  %v562 = vld [vmem:[%s552 + $0xa0] sm:$0xff]
  %v563 = vld [vmem:[%s552 + $0xb0] sm:$0xff]
  %v564 = vld [vmem:[%s552 + $0xc0] sm:$0xff]
  %v565 = vld [vmem:[%s552 + $0xd0] sm:$0xff]
  %v566 = vld [vmem:[%s552 + $0xe0] sm:$0xff]
  %v567 = vld [vmem:[%s552 + $0xf0] sm:$0xff]
  %v568 = vld [vmem:[%s552 + $0x100] sm:$0xff]
  %585 = vrot.lane.b32.xlu0 %v553, 24
  %v586 = vpop.permute.xlu0 %585
  %587 = vrot.lane.b32.xlu0 %v554, 24
  %v588 = vpop.permute.xlu0 %587
  %589 = vrot.lane.b32.xlu0 %v555, 24
  %v590 = vpop.permute.xlu0 %589
  %591 = vrot.lane.b32.xlu0 %v556, 24
  %v592 = vpop.permute.xlu0 %591
  %593 = vrot.lane.b32.xlu0 %v557, 24
  %v594 = vpop.permute.xlu0 %593
  %595 = vrot.lane.b32.xlu0 %v558, 24
  %v596 = vpop.permute.xlu0 %595
  %597 = vrot.lane.b32.xlu0 %v559, 24
  %v598 = vpop.permute.xlu0 %597
  %599 = vrot.lane.b32.xlu0 %v560, 24
  %v600 = vpop.permute.xlu0 %599
  %601 = vrot.lane.b32.xlu0 %v561, 24
  %v602 = vpop.permute.xlu0 %601
  %603 = vrot.lane.b32.xlu0 %v562, 24
  %v604 = vpop.permute.xlu0 %603
  %605 = vrot.lane.b32.xlu0 %v563, 24
  %v606 = vpop.permute.xlu0 %605
  %607 = vrot.lane.b32.xlu0 %v564, 24
  %v608 = vpop.permute.xlu0 %607
  %609 = vrot.lane.b32.xlu0 %v565, 24
  %v610 = vpop.permute.xlu0 %609
  %611 = vrot.lane.b32.xlu0 %v566, 24
  %v612 = vpop.permute.xlu0 %611
  %613 = vrot.lane.b32.xlu0 %v567, 24
  %v614 = vpop.permute.xlu0 %613
  %615 = vrot.lane.b32.xlu0 %v568, 24
  %v616 = vpop.permute.xlu0 %615
  %vm633 = vcmask 228544
  %634 = vst.msk [vmem:[#allocation2] sm:$0xff] %vm633, %v586
  %635 = vst.msk [vmem:[#allocation2 + $0x8] sm:$0xff] %vm633, %v588
  %636 = vst.msk [vmem:[#allocation2 + $0x10] sm:$0xff] %vm633, %v590
  %637 = vst.msk [vmem:[#allocation2 + $0x18] sm:$0xff] %vm633, %v592
  %638 = vst.msk [vmem:[#allocation2 + $0x20] sm:$0xff] %vm633, %v594
  %639 = vst.msk [vmem:[#allocation2 + $0x28] sm:$0xff] %vm633, %v596
  %640 = vst.msk [vmem:[#allocation2 + $0x30] sm:$0xff] %vm633, %v598
  %641 = vst.msk [vmem:[#allocation2 + $0x38] sm:$0xff] %vm633, %v600
  %642 = vst.msk [vmem:[#allocation2 + $0x40] sm:$0xff] %vm633, %v602
  %643 = vst.msk [vmem:[#allocation2 + $0x48] sm:$0xff] %vm633, %v604
  %644 = vst.msk [vmem:[#allocation2 + $0x50] sm:$0xff] %vm633, %v606
  %645 = vst.msk [vmem:[#allocation2 + $0x58] sm:$0xff] %vm633, %v608
  %646 = vst.msk [vmem:[#allocation2 + $0x60] sm:$0xff] %vm633, %v610
  %647 = vst.msk [vmem:[#allocation2 + $0x68] sm:$0xff] %vm633, %v612
  %648 = vst.msk [vmem:[#allocation2 + $0x70] sm:$0xff] %vm633, %v614
  %649 = vst.msk [vmem:[#allocation2 + $0x78] sm:$0xff] %vm633, %v616
  %s650 = scalar_lea.vmem %s0, 304
  %v651 = vld [vmem:[%s650] sm:$0xff]
  %v652 = vld [vmem:[%s650 + $0x10] sm:$0xff]
  %v653 = vld [vmem:[%s650 + $0x20] sm:$0xff]
  %v654 = vld [vmem:[%s650 + $0x30] sm:$0xff]
  %v655 = vld [vmem:[%s650 + $0x40] sm:$0xff]
  %v656 = vld [vmem:[%s650 + $0x50] sm:$0xff]
  %v657 = vld [vmem:[%s650 + $0x60] sm:$0xff]
  %v658 = vld [vmem:[%s650 + $0x70] sm:$0xff]
  %v659 = vld [vmem:[%s650 + $0x90] sm:$0xff]
  %v660 = vld [vmem:[%s650 + $0xa0] sm:$0xff]
  %v661 = vld [vmem:[%s650 + $0xb0] sm:$0xff]
  %v662 = vld [vmem:[%s650 + $0xc0] sm:$0xff]
  %v663 = vld [vmem:[%s650 + $0xd0] sm:$0xff]
  %v664 = vld [vmem:[%s650 + $0xe0] sm:$0xff]
  %v665 = vld [vmem:[%s650 + $0xf0] sm:$0xff]
  %v666 = vld [vmem:[%s650 + $0x100] sm:$0xff]
  %683 = vrot.lane.b32.xlu0 %v651, 28
  %v684 = vpop.permute.xlu0 %683
  %685 = vrot.lane.b32.xlu0 %v652, 28
  %v686 = vpop.permute.xlu0 %685
  %687 = vrot.lane.b32.xlu0 %v653, 28
  %v688 = vpop.permute.xlu0 %687
  %689 = vrot.lane.b32.xlu0 %v654, 28
  %v690 = vpop.permute.xlu0 %689
  %691 = vrot.lane.b32.xlu0 %v655, 28
  %v692 = vpop.permute.xlu0 %691
  %693 = vrot.lane.b32.xlu0 %v656, 28
  %v694 = vpop.permute.xlu0 %693
  %695 = vrot.lane.b32.xlu0 %v657, 28
  %v696 = vpop.permute.xlu0 %695
  %697 = vrot.lane.b32.xlu0 %v658, 28
  %v698 = vpop.permute.xlu0 %697
  %699 = vrot.lane.b32.xlu0 %v659, 28
  %v700 = vpop.permute.xlu0 %699
  %701 = vrot.lane.b32.xlu0 %v660, 28
  %v702 = vpop.permute.xlu0 %701
  %703 = vrot.lane.b32.xlu0 %v661, 28
  %v704 = vpop.permute.xlu0 %703
  %705 = vrot.lane.b32.xlu0 %v662, 28
  %v706 = vpop.permute.xlu0 %705
  %707 = vrot.lane.b32.xlu0 %v663, 28
  %v708 = vpop.permute.xlu0 %707
  %709 = vrot.lane.b32.xlu0 %v664, 28
  %v710 = vpop.permute.xlu0 %709
  %711 = vrot.lane.b32.xlu0 %v665, 28
  %v712 = vpop.permute.xlu0 %711
  %713 = vrot.lane.b32.xlu0 %v666, 28
  %v714 = vpop.permute.xlu0 %713
  %vm731 = vcmask 261344
  %732 = vst.msk [vmem:[#allocation2] sm:$0xff] %vm731, %v684
  %733 = vst.msk [vmem:[#allocation2 + $0x8] sm:$0xff] %vm731, %v686
  %734 = vst.msk [vmem:[#allocation2 + $0x10] sm:$0xff] %vm731, %v688
  %735 = vst.msk [vmem:[#allocation2 + $0x18] sm:$0xff] %vm731, %v690
  %736 = vst.msk [vmem:[#allocation2 + $0x20] sm:$0xff] %vm731, %v692
  %737 = vst.msk [vmem:[#allocation2 + $0x28] sm:$0xff] %vm731, %v694
  %738 = vst.msk [vmem:[#allocation2 + $0x30] sm:$0xff] %vm731, %v696
  %739 = vst.msk [vmem:[#allocation2 + $0x38] sm:$0xff] %vm731, %v698
  %740 = vst.msk [vmem:[#allocation2 + $0x40] sm:$0xff] %vm731, %v700
  %741 = vst.msk [vmem:[#allocation2 + $0x48] sm:$0xff] %vm731, %v702
  %742 = vst.msk [vmem:[#allocation2 + $0x50] sm:$0xff] %vm731, %v704
  %743 = vst.msk [vmem:[#allocation2 + $0x58] sm:$0xff] %vm731, %v706
  %744 = vst.msk [vmem:[#allocation2 + $0x60] sm:$0xff] %vm731, %v708
  %745 = vst.msk [vmem:[#allocation2 + $0x68] sm:$0xff] %vm731, %v710
  %746 = vst.msk [vmem:[#allocation2 + $0x70] sm:$0xff] %vm731, %v712
  %747 = vst.msk [vmem:[#allocation2 + $0x78] sm:$0xff] %vm731, %v714
  %v748 = vld [vmem:[%s552 + $0x1] sm:$0xff]
  %v749 = vld [vmem:[%s552 + $0x11] sm:$0xff]
  %v750 = vld [vmem:[%s552 + $0x21] sm:$0xff]
  %v751 = vld [vmem:[%s552 + $0x31] sm:$0xff]
  %v752 = vld [vmem:[%s552 + $0x41] sm:$0xff]
  %v753 = vld [vmem:[%s552 + $0x51] sm:$0xff]
  %v754 = vld [vmem:[%s552 + $0x61] sm:$0xff]
  %v755 = vld [vmem:[%s552 + $0x71] sm:$0xff]
  %v756 = vld [vmem:[%s552 + $0x91] sm:$0xff]
  %v757 = vld [vmem:[%s552 + $0xa1] sm:$0xff]
  %v758 = vld [vmem:[%s552 + $0xb1] sm:$0xff]
  %v759 = vld [vmem:[%s552 + $0xc1] sm:$0xff]
  %v760 = vld [vmem:[%s552 + $0xd1] sm:$0xff]
  %v761 = vld [vmem:[%s552 + $0xe1] sm:$0xff]
  %v762 = vld [vmem:[%s552 + $0xf1] sm:$0xff]
  %v763 = vld [vmem:[%s552 + $0x101] sm:$0xff]
  %780 = vrot.lane.b32.xlu0 %v748, 32
  %v781 = vpop.permute.xlu0 %780
  %782 = vrot.lane.b32.xlu0 %v749, 32
  %v783 = vpop.permute.xlu0 %782
  %784 = vrot.lane.b32.xlu0 %v750, 32
  %v785 = vpop.permute.xlu0 %784
  %786 = vrot.lane.b32.xlu0 %v751, 32
  %v787 = vpop.permute.xlu0 %786
  %788 = vrot.lane.b32.xlu0 %v752, 32
  %v789 = vpop.permute.xlu0 %788
  %790 = vrot.lane.b32.xlu0 %v753, 32
  %v791 = vpop.permute.xlu0 %790
  %792 = vrot.lane.b32.xlu0 %v754, 32
  %v793 = vpop.permute.xlu0 %792
  %794 = vrot.lane.b32.xlu0 %v755, 32
  %v795 = vpop.permute.xlu0 %794
  %796 = vrot.lane.b32.xlu0 %v756, 32
  %v797 = vpop.permute.xlu0 %796
  %798 = vrot.lane.b32.xlu0 %v757, 32
  %v799 = vpop.permute.xlu0 %798
  %800 = vrot.lane.b32.xlu0 %v758, 32
  %v801 = vpop.permute.xlu0 %800
  %802 = vrot.lane.b32.xlu0 %v759, 32
  %v803 = vpop.permute.xlu0 %802
  %804 = vrot.lane.b32.xlu0 %v760, 32
  %v805 = vpop.permute.xlu0 %804
  %806 = vrot.lane.b32.xlu0 %v761, 32
  %v807 = vpop.permute.xlu0 %806
  %808 = vrot.lane.b32.xlu0 %v762, 32
  %v809 = vpop.permute.xlu0 %808
  %810 = vrot.lane.b32.xlu0 %v763, 32
  %v811 = vpop.permute.xlu0 %810
  %vm828 = vcmask 294144
  %829 = vst.msk [vmem:[#allocation2] sm:$0xff] %vm828, %v781
  %830 = vst.msk [vmem:[#allocation2 + $0x8] sm:$0xff] %vm828, %v783
  %831 = vst.msk [vmem:[#allocation2 + $0x10] sm:$0xff] %vm828, %v785
  %832 = vst.msk [vmem:[#allocation2 + $0x18] sm:$0xff] %vm828, %v787
  %833 = vst.msk [vmem:[#allocation2 + $0x20] sm:$0xff] %vm828, %v789
  %834 = vst.msk [vmem:[#allocation2 + $0x28] sm:$0xff] %vm828, %v791
  %835 = vst.msk [vmem:[#allocation2 + $0x30] sm:$0xff] %vm828, %v793
  %836 = vst.msk [vmem:[#allocation2 + $0x38] sm:$0xff] %vm828, %v795
  %837 = vst.msk [vmem:[#allocation2 + $0x40] sm:$0xff] %vm828, %v797
  %838 = vst.msk [vmem:[#allocation2 + $0x48] sm:$0xff] %vm828, %v799
  %839 = vst.msk [vmem:[#allocation2 + $0x50] sm:$0xff] %vm828, %v801
  %840 = vst.msk [vmem:[#allocation2 + $0x58] sm:$0xff] %vm828, %v803
  %841 = vst.msk [vmem:[#allocation2 + $0x60] sm:$0xff] %vm828, %v805
  %842 = vst.msk [vmem:[#allocation2 + $0x68] sm:$0xff] %vm828, %v807
  %843 = vst.msk [vmem:[#allocation2 + $0x70] sm:$0xff] %vm828, %v809
  %844 = vst.msk [vmem:[#allocation2 + $0x78] sm:$0xff] %vm828, %v811
  %v845 = vld [vmem:[#allocation2] sm:$0xff]
  %v846 = vld [vmem:[#allocation2 + $0x8] sm:$0xff]
  %v847 = vld [vmem:[#allocation2 + $0x10] sm:$0xff]
  %v848 = vld [vmem:[#allocation2 + $0x18] sm:$0xff]
  %v849 = vld [vmem:[#allocation2 + $0x20] sm:$0xff]
  %v850 = vld [vmem:[#allocation2 + $0x28] sm:$0xff]
  %v851 = vld [vmem:[#allocation2 + $0x30] sm:$0xff]
  %v852 = vld [vmem:[#allocation2 + $0x38] sm:$0xff]
  %v853 = vld [vmem:[#allocation2 + $0x40] sm:$0xff]
  %v854 = vld [vmem:[#allocation2 + $0x48] sm:$0xff]
  %v855 = vld [vmem:[#allocation2 + $0x50] sm:$0xff]
  %v856 = vld [vmem:[#allocation2 + $0x58] sm:$0xff]
  %v857 = vld [vmem:[#allocation2 + $0x60] sm:$0xff]
  %v858 = vld [vmem:[#allocation2 + $0x68] sm:$0xff]
  %v859 = vld [vmem:[#allocation2 + $0x70] sm:$0xff]
  %v860 = vld [vmem:[#allocation2 + $0x78] sm:$0xff]
  %v861 = vld [vmem:[%s1] sm:$0xff]
  %v862 = vld [vmem:[%s1 + $0x8] sm:$0xff]
  %v863 = vld [vmem:[%s1 + $0x10] sm:$0xff]
  %v864 = vld [vmem:[%s1 + $0x18] sm:$0xff]
  %v865 = vld [vmem:[%s1 + $0x20] sm:$0xff]
  %v867 = vsel %vm14, %v845, 0
  %v870 = vsel %vm14, %v846, 0
  %v873 = vsel %vm14, %v847, 0
  %v876 = vsel %vm14, %v848, 0
  %v879 = vsel %vm14, %v849, 0
  %v882 = vsel %vm14, %v850, 0
  %v885 = vsel %vm14, %v851, 0
  %v888 = vsel %vm14, %v852, 0
  %v891 = vsel %vm14, %v853, 0
  %v894 = vsel %vm14, %v854, 0
  %v897 = vsel %vm14, %v855, 0
  %v900 = vsel %vm14, %v856, 0
  %v903 = vsel %vm14, %v857, 0
  %v906 = vsel %vm14, %v858, 0
  %v909 = vsel %vm14, %v859, 0
  %v912 = vsel %vm14, %v860, 0
  %914 = vmatpush.msra.mxu0 0.0
  %915 = vmatpush.msra.mxu0 0.0
  %916 = vmatpush.msra.mxu0 0.0
  %917 = vmatpush.msra.mxu0 0.0
  %918 = vmatpush.msra.mxu0 0.0
  %919 = vmatpush.msra.mxu0 0.0
  %920 = vmatpush.msra.mxu0 0.0
  %921 = vmatpush.msra.mxu0 0.0
  %922 = vmatpush.msra.mxu0 0.0
  %923 = vmatpush.msra.mxu0 0.0
  %924 = vmatpush.msra.mxu0 0.0
  %925 = vmatpush.msra.mxu0 %v865
  %926 = vmatpush.msra.mxu0 %v864
  %927 = vmatpush.msra.mxu0 %v863
  %928 = vmatpush.msra.mxu0 %v862
  %929 = vmatpush.msra.mxu0 %v861
  %930 = vmatmul.f32.gmra.mxu0 %v867
  %v931 = vpop.f32.mrf.mxu0
  %v932 = vadd.f32 0.0, %v931
  %933 = vmatmul.f32.gmra.mxu0 %v870
  %v934 = vpop.f32.mrf.mxu0
  %v935 = vadd.f32 0.0, %v934
  %936 = vmatmul.f32.gmra.mxu0 %v873
  %v937 = vpop.f32.mrf.mxu0
  %v938 = vadd.f32 0.0, %v937
  %939 = vmatmul.f32.gmra.mxu0 %v876
  %v940 = vpop.f32.mrf.mxu0
  %v941 = vadd.f32 0.0, %v940
  %942 = vmatmul.f32.gmra.mxu0 %v879
  %v943 = vpop.f32.mrf.mxu0
  %v944 = vadd.f32 0.0, %v943
  %945 = vmatmul.f32.gmra.mxu0 %v882
  %v946 = vpop.f32.mrf.mxu0
  %v947 = vadd.f32 0.0, %v946
  %948 = vmatmul.f32.gmra.mxu0 %v885
  %v949 = vpop.f32.mrf.mxu0
  %v950 = vadd.f32 0.0, %v949
  %951 = vmatmul.f32.gmra.mxu0 %v888
  %v952 = vpop.f32.mrf.mxu0
  %v953 = vadd.f32 0.0, %v952
  %954 = vmatmul.f32.gmra.mxu0 %v891
  %v955 = vpop.f32.mrf.mxu0
  %v956 = vadd.f32 0.0, %v955
  %957 = vmatmul.f32.gmra.mxu0 %v894
  %v958 = vpop.f32.mrf.mxu0
  %v959 = vadd.f32 0.0, %v958
  %960 = vmatmul.f32.gmra.mxu0 %v897
  %v961 = vpop.f32.mrf.mxu0
  %v962 = vadd.f32 0.0, %v961
  %963 = vmatmul.f32.gmra.mxu0 %v900
  %v964 = vpop.f32.mrf.mxu0
  %v965 = vadd.f32 0.0, %v964
  %966 = vmatmul.f32.gmra.mxu0 %v903
  %v967 = vpop.f32.mrf.mxu0
  %v968 = vadd.f32 0.0, %v967
  %969 = vmatmul.f32.gmra.mxu0 %v906
  %v970 = vpop.f32.mrf.mxu0
  %v971 = vadd.f32 0.0, %v970
  %972 = vmatmul.f32.gmra.mxu0 %v909
  %v973 = vpop.f32.mrf.mxu0
  %v974 = vadd.f32 0.0, %v973
  %975 = vmatmul.f32.gmra.mxu0 %v912
  %v976 = vpop.f32.mrf.mxu0
  %v977 = vadd.f32 0.0, %v976
  %978 = vdwg.mxu0
  %979 = vxpose.xlu0.b32.start [1/16] %v932, 128
  %980 = vxpose.xlu0.b32.cont [2/16] %v935, 128
  %981 = vxpose.xlu0.b32.cont [3/16] %v938, 128
  %982 = vxpose.xlu0.b32.cont [4/16] %v941, 128
  %983 = vxpose.xlu0.b32.cont [5/16] %v944, 128
  %984 = vxpose.xlu0.b32.cont [6/16] %v947, 128
  %985 = vxpose.xlu0.b32.cont [7/16] %v950, 128
  %986 = vxpose.xlu0.b32.cont [8/16] %v953, 128
  %987 = vxpose.xlu0.b32.cont [9/16] %v956, 128
  %988 = vxpose.xlu0.b32.cont [10/16] %v959, 128
  %989 = vxpose.xlu0.b32.cont [11/16] %v962, 128
  %990 = vxpose.xlu0.b32.cont [12/16] %v965, 128
  %991 = vxpose.xlu0.b32.cont [13/16] %v968, 128
  %992 = vxpose.xlu0.b32.cont [14/16] %v971, 128
  %993 = vxpose.xlu0.b32.cont [15/16] %v974, 128
  %994 = vxpose.xlu0.b32.end [16/16] %v977, 128
  %v995 = vpop.trf.xlu0
  %v996 = vpop.trf.xlu0
  %v997 = vpop.trf.xlu0
  %v998 = vpop.trf.xlu0
  %v999 = vpop.trf.xlu0
  %v1000 = vpop.trf.xlu0
  %v1001 = vpop.trf.xlu0
  %v1002 = vpop.trf.xlu0
  %v1003 = vpop.trf.xlu0
  %v1004 = vpop.trf.xlu0
  %v1005 = vpop.trf.xlu0
  %v1006 = vpop.trf.xlu0
  %v1007 = vpop.trf.xlu0
  %v1008 = vpop.trf.xlu0
  %v1009 = vpop.trf.xlu0
  %v1010 = vpop.trf.xlu0
  %v1011 = vld [vmem:[%s2] sm:$0xff]
  %1013 = vset.pattern.permute.xlu0 0
  %1014 = vperm.xlu0 %1013, %v1011
  %v1015 = vpop.permute.xlu0 %1014
  %v1017 = vadd.f32 %v995, %v1015
  %1018 = vst [vmem:[%s3] sm:$0xff] %v1017
  // Predicated region
  $region14: #{forward.1} parent=0 // pred_check
    _
  $region15: #{forward.1} parent=0 // pred_check_branch
    %1020 = sbr.rel (0) target = $region17
  $region16: #{forward.1} parent=0 // pred_region
    _
  $region17: #{forward.1} parent=0 // pred_fallthru
    _
  // Predicated region
  $region18: #{forward.1} parent=0 // pred_check
    _
  $region19: #{forward.1} parent=0 // pred_check_branch
    %1022 = sbr.rel (0) target = $region21
  $region20: #{forward.1} parent=0 // pred_region
    _
  $region21: #{forward.1} parent=0 // pred_fallthru
    _

</llo_original>
